<compile_context>
chip_gen: v7x
topology: tpu7x:2x2x1
jax: 0.10.0
libtpu: 0.0.40
codegen_flags: <defaults>
</compile_context>

<pallas_src>
import jax
import jax.numpy as jnp
from jax.experimental import pallas as pl
from jax.experimental.pallas import tpu as pltpu

HIDDEN_SIZE = 64
H_PAD = 128          # hidden / per-gate width padded to one full 128-lane vreg
LANES = 128
SUBLANES = 8


def _round_up(n, m):
    return ((n + m - 1) // m) * m


# ---------------------------------------------------------------------------
# Kernel: one grid step == one GRU timestep.  Weights + hidden carry resident.
# ---------------------------------------------------------------------------
def _agent_rollout_kernel(obs_ref, h0_ref,
                          w1_ref, b1_ref,
                          wg_ref, bg_ref,
                          whn_ref, bhn_ref,
                          w2_ref, b2_ref,
                          out_ref, hcarry_ref):
    t = pl.program_id(0)

    # Initialize the carried hidden state from h0 on the first step.  The
    # h-carry output block index is constant across the grid, so it lives in
    # VMEM for the whole rollout (accumulator pattern).
    @pl.when(t == 0)
    def _():
        hcarry_ref[...] = h0_ref[...]

    h = hcarry_ref[...]                          # (B, H_PAD); pad lanes are 0
    obs = obs_ref[0]                             # (B, IN_PAD)

    # fc1 + ReLU.  Padded output lanes stay 0: relu(obs @ 0 + 0) == 0.
    x = jnp.maximum(
        jnp.dot(obs, w1_ref[...], preferred_element_type=jnp.float32) + b1_ref[...],
        0.0)                                     # (B, H_PAD)

    # Fused GRU gate matmul: a single K = 2*H_PAD contraction yields gx + gh
    # for all three gates; gate g starts at lane offset g*H_PAD (vreg-aligned).
    xh = jnp.concatenate([x, h], axis=-1)        # (B, 2*H_PAD)
    comb = jnp.dot(xh, wg_ref[...], preferred_element_type=jnp.float32) + bg_ref[...]
    # The h-path of the "n" gate is needed separately because PyTorch GRUCell
    # computes n = tanh(gx_n + r * (W_hn h + b_hn)).
    gh_n = jnp.dot(h, whn_ref[...], preferred_element_type=jnp.float32) + bhn_ref[...]

    r = jax.nn.sigmoid(comb[:, 0 * H_PAD:1 * H_PAD])
    z = jax.nn.sigmoid(comb[:, 1 * H_PAD:2 * H_PAD])
    # comb_n = gx_n + gh_n  =>  gx_n + r*gh_n == comb_n + (r - 1)*gh_n
    n = jnp.tanh(comb[:, 2 * H_PAD:3 * H_PAD] + (r - 1.0) * gh_n)
    # Padded lanes: r=z=0.5, n=0, h=0  =>  h_next pad = 0.5*0 + 0.5*0 = 0.
    h_next = (1.0 - z) * n + z * h

    hcarry_ref[...] = h_next

    # fc2 -> lane-dense (OUT_PAD multiple of 128) store of this timestep.
    out_ref[0] = (jnp.dot(h_next, w2_ref[...], preferred_element_type=jnp.float32)
                  + b2_ref[...]).astype(out_ref.dtype)


# ---------------------------------------------------------------------------
# Parameter packing: logical (PyTorch-style, transposed) -> padded/fused layout
# ---------------------------------------------------------------------------
def pack_params(p, in_feature, out_feature):
    """All padding rows/cols are zero so the padded kernel math is exact."""
    H = HIDDEN_SIZE
    in_pad = _round_up(in_feature, LANES)
    out_pad = _round_up(out_feature, LANES)
    f32 = jnp.float32

    w1 = jnp.zeros((in_pad, H_PAD), f32).at[:in_feature, :H].set(p["w1"])
    b1 = jnp.zeros((1, H_PAD), f32).at[:, :H].set(p["b1"])

    # Fused gate weights: rows = [x-path (H_PAD) | h-path (H_PAD)],
    # cols = [r | z | n], each gate padded to H_PAD lanes.
    wg = jnp.zeros((2 * H_PAD, 3 * H_PAD), f32)
    bg = jnp.zeros((1, 3 * H_PAD), f32)
    for g in range(3):
        col = g * H_PAD
        wg = wg.at[:H, col:col + H].set(p["wih"][:, g * H:(g + 1) * H])
        wg = wg.at[H_PAD:H_PAD + H, col:col + H].set(p["whh"][:, g * H:(g + 1) * H])
        bg = bg.at[:, col:col + H].set(p["bih"][:, g * H:(g + 1) * H]
                                       + p["bhh"][:, g * H:(g + 1) * H])

    whn = jnp.zeros((H_PAD, H_PAD), f32).at[:H, :H].set(p["whh"][:, 2 * H:3 * H])
    bhn = jnp.zeros((1, H_PAD), f32).at[:, :H].set(p["bhh"][:, 2 * H:3 * H])

    w2 = jnp.zeros((H_PAD, out_pad), f32).at[:H, :out_feature].set(p["w2"])
    b2 = jnp.zeros((1, out_pad), f32).at[:, :out_feature].set(p["b2"])

    return {"w1": w1, "b1": b1, "wg": wg, "bg": bg,
            "whn": whn, "bhn": bhn, "w2": w2, "b2": b2,
            "in_feature": in_feature, "out_feature": out_feature}


# ---------------------------------------------------------------------------
# Wrappers
# ---------------------------------------------------------------------------
def agent_rollout(obs_seq, h0, packed):
    """obs_seq: (T, B, in_feature), h0: (..., HIDDEN_SIZE).
    Returns (h_final (B, HIDDEN_SIZE), out_seq (T, B, out_feature))."""
    T, B, in_feature = obs_seq.shape
    assert in_feature == packed["in_feature"]
    out_feature = packed["out_feature"]
    in_pad = packed["w1"].shape[0]
    out_pad = packed["w2"].shape[1]
    b_pad = _round_up(B, SUBLANES)

    obs_p = jnp.zeros((T, b_pad, in_pad), jnp.float32)
    obs_p = obs_p.at[:, :B, :in_feature].set(obs_seq.astype(jnp.float32))
    h0_p = jnp.zeros((b_pad, H_PAD), jnp.float32)
    h0_p = h0_p.at[:B, :HIDDEN_SIZE].set(
        h0.reshape(-1, HIDDEN_SIZE).astype(jnp.float32))

    weight_names = ("w1", "b1", "wg", "bg", "whn", "bhn", "w2", "b2")
    weights = [packed[k] for k in weight_names]

    def resident_2d(shape):
        return pl.BlockSpec(shape, lambda t: (0, 0))   # stays in VMEM; no re-DMA

    in_specs = ([pl.BlockSpec((1, b_pad, in_pad), lambda t: (t, 0, 0)),   # obs[t]
                 pl.BlockSpec((b_pad, H_PAD), lambda t: (0, 0))]          # h0
                + [resident_2d(w.shape) for w in weights])

    out_specs = (pl.BlockSpec((1, b_pad, out_pad), lambda t: (t, 0, 0)),  # out[t]
                 pl.BlockSpec((b_pad, H_PAD), lambda t: (0, 0)))          # h carry

    out_seq_p, h_final_p = pl.pallas_call(
        _agent_rollout_kernel,
        grid=(T,),
        in_specs=in_specs,
        out_specs=out_specs,
        out_shape=(jax.ShapeDtypeStruct((T, b_pad, out_pad), jnp.float32),
                   jax.ShapeDtypeStruct((b_pad, H_PAD), jnp.float32)),
        compiler_params=pltpu.CompilerParams(
            dimension_semantics=("arbitrary",)),   # recurrence -> sequential grid
    )(obs_p, h0_p, *weights)

    return (h_final_p[:B, :HIDDEN_SIZE],
            out_seq_p[:, :B, :out_feature])


def agent_forward(obs, h, packed):
    """Single GRU step == original PyTorch Agent.forward: returns (h_next, out)."""
    h_next, out_seq = agent_rollout(obs[None], h, packed)
    return h_next, out_seq[0]


# ---------------------------------------------------------------------------
# Logical parameter init (PyTorch uniform(-1/sqrt(fan_in)) style) and reference
# ---------------------------------------------------------------------------
def init_params(key, in_feature, out_feature):
    ks = jax.random.split(key, 8)

    def u(k, shape, fan_in):
        bound = 1.0 / jnp.sqrt(jnp.asarray(fan_in, jnp.float32))
        return jax.random.uniform(k, shape, jnp.float32, -bound, bound)

    H = HIDDEN_SIZE
    return {
        "w1": u(ks[0], (in_feature, H), in_feature),
        "b1": u(ks[1], (1, H), in_feature),
        "wih": u(ks[2], (H, 3 * H), H),
        "bih": u(ks[3], (1, 3 * H), H),
        "whh": u(ks[4], (H, 3 * H), H),
        "bhh": u(ks[5], (1, 3 * H), H),
        "w2": u(ks[6], (H, out_feature), H),
        "b2": u(ks[7], (1, out_feature), H),
    }


def _reference_forward(obs, h, p):
    """Pure-JAX reference matching PyTorch Agent.forward semantics."""
    h = h.reshape(-1, HIDDEN_SIZE)
    x = jnp.maximum(obs @ p["w1"] + p["b1"], 0.0)
    gx = x @ p["wih"] + p["bih"]
    gh = h @ p["whh"] + p["bhh"]
    H = HIDDEN_SIZE
    r = jax.nn.sigmoid(gx[:, :H] + gh[:, :H])
    z = jax.nn.sigmoid(gx[:, H:2 * H] + gh[:, H:2 * H])
    n = jnp.tanh(gx[:, 2 * H:] + r * gh[:, 2 * H:])
    h_next = (1.0 - z) * n + z * h
    return h_next, h_next @ p["w2"] + p["b2"]


def _reference_rollout(obs_seq, h0, p):
    def step(h, obs):
        h_next, out = _reference_forward(obs, h, p)
        return h_next, out
    h_final, outs = jax.lax.scan(step, h0.reshape(-1, HIDDEN_SIZE), obs_seq)
    return h_final, outs


if __name__ == "__main__":
    key = jax.random.PRNGKey(0)
    k_obs, k_h, k_p = jax.random.split(key, 3)

    T = 12           # rollout length fused into one pallas_call
    B = 8            # batch * n_agents (flattened)
    in_feature = 32  # obs + action + agent one-hot embedding
    out_feature = 16

    obs_seq = jax.random.normal(k_obs, (T, B, in_feature), jnp.float32)
    h0 = jax.random.normal(k_h, (B, HIDDEN_SIZE), jnp.float32)

    params = init_params(k_p, in_feature, out_feature)
    packed = pack_params(params, in_feature, out_feature)

    # --- single step (original Agent.forward semantics) ---------------------
    h_next, out = agent_forward(obs_seq[0], h0, packed)
    jax.block_until_ready((h_next, out))
    h_ref, o_ref = _reference_forward(obs_seq[0], h0, params)
    assert jnp.allclose(h_next, h_ref, atol=1e-4, rtol=1e-4), "single-step h_next mismatch"
    assert jnp.allclose(out, o_ref, atol=1e-4, rtol=1e-4), "single-step out mismatch"

    # --- fused T-step rollout ------------------------------------------------
    h_final, out_seq = agent_rollout(obs_seq, h0, packed)
    jax.block_until_ready((h_final, out_seq))
    h_final_ref, out_seq_ref = _reference_rollout(obs_seq, h0, params)
    assert jnp.allclose(h_final, h_final_ref, atol=1e-4, rtol=1e-4), "rollout h_final mismatch"
    assert jnp.allclose(out_seq, out_seq_ref, atol=1e-4, rtol=1e-4), "rollout out_seq mismatch"

    print("KERNEL_OK")
</pallas_src>

<mosaic_0001>
module attributes {stable_mosaic.version = 11 : i64} {
  func.func @_agent_rollout_kernel(%arg0: i32, %arg1: memref<1x8x128xf32, #tpu.memory_space<vmem>>, %arg2: memref<8x128xf32, #tpu.memory_space<vmem>>, %arg3: memref<128x128xf32, #tpu.memory_space<vmem>>, %arg4: memref<1x128xf32, #tpu.memory_space<vmem>>, %arg5: memref<256x384xf32, #tpu.memory_space<vmem>>, %arg6: memref<1x384xf32, #tpu.memory_space<vmem>>, %arg7: memref<128x128xf32, #tpu.memory_space<vmem>>, %arg8: memref<1x128xf32, #tpu.memory_space<vmem>>, %arg9: memref<128x128xf32, #tpu.memory_space<vmem>>, %arg10: memref<1x128xf32, #tpu.memory_space<vmem>>, %arg11: memref<1x8x128xf32, #tpu.memory_space<vmem>>, %arg12: memref<8x128xf32, #tpu.memory_space<vmem>>) attributes {dimension_semantics = [#tpu.dimension_semantics<arbitrary>], iteration_bounds = array<i64: 1>, scalar_prefetch = 0 : i64, scratch_operands = 0 : i64, tpu.core_type = #tpu.core_type<tc>, window_params = [{transform_indices = @transform_0, window_bounds = array<i64: 1, 8, 128>}, {pipeline_mode = #tpu.pipeline_mode<synchronous>, transform_indices = @transform_1, window_bounds = array<i64: 8, 128>}, {pipeline_mode = #tpu.pipeline_mode<synchronous>, transform_indices = @transform_2, window_bounds = array<i64: 128, 128>}, {pipeline_mode = #tpu.pipeline_mode<synchronous>, transform_indices = @transform_3, window_bounds = array<i64: 1, 128>}, {pipeline_mode = #tpu.pipeline_mode<synchronous>, transform_indices = @transform_4, window_bounds = array<i64: 256, 384>}, {pipeline_mode = #tpu.pipeline_mode<synchronous>, transform_indices = @transform_5, window_bounds = array<i64: 1, 384>}, {pipeline_mode = #tpu.pipeline_mode<synchronous>, transform_indices = @transform_6, window_bounds = array<i64: 128, 128>}, {pipeline_mode = #tpu.pipeline_mode<synchronous>, transform_indices = @transform_7, window_bounds = array<i64: 1, 128>}, {pipeline_mode = #tpu.pipeline_mode<synchronous>, transform_indices = @transform_8, window_bounds = array<i64: 128, 128>}, {pipeline_mode = #tpu.pipeline_mode<synchronous>, transform_indices = @transform_9, window_bounds = array<i64: 1, 128>}, {transform_indices = @transform_10, window_bounds = array<i64: 1, 8, 128>}, {pipeline_mode = #tpu.pipeline_mode<synchronous>, transform_indices = @transform_11, window_bounds = array<i64: 8, 128>}]} {
    %c0_i32 = arith.constant 0 : i32
    %0 = arith.cmpi eq, %arg0, %c0_i32 : i32
    %1 = arith.extui %0 : i1 to i32
    %c0_i32_0 = arith.constant 0 : i32
    %2 = arith.cmpi ne, %1, %c0_i32_0 : i32
    scf.if %2 {
      %c0_34 = arith.constant 0 : index
      %c0_35 = arith.constant 0 : index
      %56 = vector.load %arg2[%c0_34, %c0_35] : memref<8x128xf32, #tpu.memory_space<vmem>>, vector<8x128xf32>
      %c0_36 = arith.constant 0 : index
      %c0_37 = arith.constant 0 : index
      %57 = vector.load %arg12[%c0_36, %c0_37] : memref<8x128xf32, #tpu.memory_space<vmem>>, vector<8x128xf32>
      tpu.vector_store %arg12[%c0_36, %c0_37], %56 {strides = array<i32>} : memref<8x128xf32, #tpu.memory_space<vmem>>, vector<8x128xf32>,
    } else {
    }
    %c0 = arith.constant 0 : index
    %c0_1 = arith.constant 0 : index
    %3 = vector.load %arg12[%c0, %c0_1] : memref<8x128xf32, #tpu.memory_space<vmem>>, vector<8x128xf32>
    %c0_2 = arith.constant 0 : index
    %c0_3 = arith.constant 0 : index
    %c0_4 = arith.constant 0 : index
    %4 = vector.load %arg1[%c0_2, %c0_3, %c0_4] : memref<1x8x128xf32, #tpu.memory_space<vmem>>, vector<1x8x128xf32>
    %5 = vector.shape_cast %4 : vector<1x8x128xf32> to vector<8x128xf32>
    %c0_5 = arith.constant 0 : index
    %c0_6 = arith.constant 0 : index
    %6 = vector.load %arg3[%c0_5, %c0_6] : memref<128x128xf32, #tpu.memory_space<vmem>>, vector<128x128xf32>
    %cst = arith.constant dense<0.000000e+00> : vector<8x128xf32>
    %7 = tpu.matmul %5, %6, %cst {dimension_numbers = #tpu.dot_dimension_numbers<[1], [0], [0], [1], [0, 0, 1, 1], [], []>} : vector<8x128xf32>, vector<128x128xf32>, vector<8x128xf32> -> vector<8x128xf32>
    %c0_7 = arith.constant 0 : index
    %c0_8 = arith.constant 0 : index
    %8 = vector.load %arg4[%c0_7, %c0_8] : memref<1x128xf32, #tpu.memory_space<vmem>>, vector<1x128xf32>
    %9 = vector.broadcast %8 : vector<1x128xf32> to vector<8x128xf32>
    %10 = arith.addf %7, %9 : vector<8x128xf32>
    %cst_9 = arith.constant 0.000000e+00 : f32
    %11 = vector.broadcast %cst_9 : f32 to vector<8x128xf32>
    %12 = arith.maximumf %10, %11 : vector<8x128xf32>
    %13 = tpu.concatenate %12, %3 in 1 : vector<8x128xf32>, vector<8x128xf32> -> vector<8x256xf32>
    %c0_10 = arith.constant 0 : index
    %c0_11 = arith.constant 0 : index
    %14 = vector.load %arg5[%c0_10, %c0_11] : memref<256x384xf32, #tpu.memory_space<vmem>>, vector<256x384xf32>
    %cst_12 = arith.constant dense<0.000000e+00> : vector<8x384xf32>
    %15 = tpu.matmul %13, %14, %cst_12 {dimension_numbers = #tpu.dot_dimension_numbers<[1], [0], [0], [1], [0, 0, 1, 1], [], []>} : vector<8x256xf32>, vector<256x384xf32>, vector<8x384xf32> -> vector<8x384xf32>
    %c0_13 = arith.constant 0 : index
    %c0_14 = arith.constant 0 : index
    %16 = vector.load %arg6[%c0_13, %c0_14] : memref<1x384xf32, #tpu.memory_space<vmem>>, vector<1x384xf32>
    %17 = vector.broadcast %16 : vector<1x384xf32> to vector<8x384xf32>
    %18 = arith.addf %15, %17 : vector<8x384xf32>
    %c0_15 = arith.constant 0 : index
    %c0_16 = arith.constant 0 : index
    %19 = vector.load %arg7[%c0_15, %c0_16] : memref<128x128xf32, #tpu.memory_space<vmem>>, vector<128x128xf32>
    %cst_17 = arith.constant dense<0.000000e+00> : vector<8x128xf32>
    %20 = tpu.matmul %3, %19, %cst_17 {dimension_numbers = #tpu.dot_dimension_numbers<[1], [0], [0], [1], [0, 0, 1, 1], [], []>} : vector<8x128xf32>, vector<128x128xf32>, vector<8x128xf32> -> vector<8x128xf32>
    %c0_18 = arith.constant 0 : index
    %c0_19 = arith.constant 0 : index
    %21 = vector.load %arg8[%c0_18, %c0_19] : memref<1x128xf32, #tpu.memory_space<vmem>>, vector<1x128xf32>
    %22 = vector.broadcast %21 : vector<1x128xf32> to vector<8x128xf32>
    %23 = arith.addf %20, %22 : vector<8x128xf32>
    %24 = vector.extract_strided_slice %18 {offsets = [0, 0], sizes = [8, 128], strides = [1, 1]} : vector<8x384xf32> to vector<8x128xf32>
    %25 = arith.negf %24 : vector<8x128xf32>
    %26 = math.exp %25 : vector<8x128xf32>
    %cst_20 = arith.constant 1.000000e+00 : f32
    %27 = vector.broadcast %cst_20 : f32 to vector<8x128xf32>
    %28 = arith.addf %27, %26 : vector<8x128xf32>
    %29 = arith.divf %27, %28 : vector<8x128xf32>
    %30 = vector.extract_strided_slice %18 {offsets = [0, 128], sizes = [8, 128], strides = [1, 1]} : vector<8x384xf32> to vector<8x128xf32>
    %31 = arith.negf %30 : vector<8x128xf32>
    %32 = math.exp %31 : vector<8x128xf32>
    %cst_21 = arith.constant 1.000000e+00 : f32
    %33 = vector.broadcast %cst_21 : f32 to vector<8x128xf32>
    %34 = arith.addf %33, %32 : vector<8x128xf32>
    %35 = arith.divf %33, %34 : vector<8x128xf32>
    %36 = vector.extract_strided_slice %18 {offsets = [0, 256], sizes = [8, 128], strides = [1, 1]} : vector<8x384xf32> to vector<8x128xf32>
    %cst_22 = arith.constant 1.000000e+00 : f32
    %37 = vector.broadcast %cst_22 : f32 to vector<8x128xf32>
    %38 = arith.subf %29, %37 : vector<8x128xf32>
    %39 = arith.mulf %38, %23 : vector<8x128xf32>
    %40 = arith.addf %36, %39 : vector<8x128xf32>
    %41 = math.tanh %40 : vector<8x128xf32>
    %cst_23 = arith.constant 1.000000e+00 : f32
    %42 = vector.broadcast %cst_23 : f32 to vector<8x128xf32>
    %43 = arith.subf %42, %35 : vector<8x128xf32>
    %44 = arith.mulf %43, %41 : vector<8x128xf32>
    %45 = arith.mulf %35, %3 : vector<8x128xf32>
    %46 = arith.addf %44, %45 : vector<8x128xf32>
    %c0_24 = arith.constant 0 : index
    %c0_25 = arith.constant 0 : index
    %47 = vector.load %arg12[%c0_24, %c0_25] : memref<8x128xf32, #tpu.memory_space<vmem>>, vector<8x128xf32>
    tpu.vector_store %arg12[%c0_24, %c0_25], %46 {strides = array<i32>} : memref<8x128xf32, #tpu.memory_space<vmem>>, vector<8x128xf32>,
    %c0_26 = arith.constant 0 : index
    %c0_27 = arith.constant 0 : index
    %48 = vector.load %arg9[%c0_26, %c0_27] : memref<128x128xf32, #tpu.memory_space<vmem>>, vector<128x128xf32>
    %cst_28 = arith.constant dense<0.000000e+00> : vector<8x128xf32>
    %49 = tpu.matmul %46, %48, %cst_28 {dimension_numbers = #tpu.dot_dimension_numbers<[1], [0], [0], [1], [0, 0, 1, 1], [], []>} : vector<8x128xf32>, vector<128x128xf32>, vector<8x128xf32> -> vector<8x128xf32>
    %c0_29 = arith.constant 0 : index
    %c0_30 = arith.constant 0 : index
    %50 = vector.load %arg10[%c0_29, %c0_30] : memref<1x128xf32, #tpu.memory_space<vmem>>, vector<1x128xf32>
    %51 = vector.broadcast %50 : vector<1x128xf32> to vector<8x128xf32>
    %52 = arith.addf %49, %51 : vector<8x128xf32>
    %c0_31 = arith.constant 0 : index
    %c0_32 = arith.constant 0 : index
    %c0_33 = arith.constant 0 : index
    %53 = vector.load %arg11[%c0_31, %c0_32, %c0_33] : memref<1x8x128xf32, #tpu.memory_space<vmem>>, vector<1x8x128xf32>
    %54 = vector.shape_cast %53 : vector<1x8x128xf32> to vector<8x128xf32>
    %55 = vector.shape_cast %52 : vector<8x128xf32> to vector<1x8x128xf32>
    tpu.vector_store %arg11[%c0_31, %c0_32, %c0_33], %55 {strides = array<i32>} : memref<1x8x128xf32, #tpu.memory_space<vmem>>, vector<1x8x128xf32>,
    return
  }
  func.func @transform_0(%arg0: i32) -> (i32, i32, i32) {
    %c0_i32 = arith.constant 0 : i32
    %c0_i32_0 = arith.constant 0 : i32
    %c0_i32_1 = arith.constant 0 : i32
    return %arg0, %c0_i32, %c0_i32_0 : i32, i32, i32
  }
  func.func @transform_1(%arg0: i32) -> (i32, i32) {
    %c0_i32 = arith.constant 0 : i32
    %c0_i32_0 = arith.constant 0 : i32
    %c0_i32_1 = arith.constant 0 : i32
    return %c0_i32, %c0_i32_0 : i32, i32
  }
  func.func @transform_2(%arg0: i32) -> (i32, i32) {
    %c0_i32 = arith.constant 0 : i32
    %c0_i32_0 = arith.constant 0 : i32
    %c0_i32_1 = arith.constant 0 : i32
    return %c0_i32, %c0_i32_0 : i32, i32
  }
  func.func @transform_3(%arg0: i32) -> (i32, i32) {
    %c0_i32 = arith.constant 0 : i32
    %c0_i32_0 = arith.constant 0 : i32
    %c0_i32_1 = arith.constant 0 : i32
    return %c0_i32, %c0_i32_0 : i32, i32
  }
  func.func @transform_4(%arg0: i32) -> (i32, i32) {
    %c0_i32 = arith.constant 0 : i32
    %c0_i32_0 = arith.constant 0 : i32
    %c0_i32_1 = arith.constant 0 : i32
    return %c0_i32, %c0_i32_0 : i32, i32
  }
  func.func @transform_5(%arg0: i32) -> (i32, i32) {
    %c0_i32 = arith.constant 0 : i32
    %c0_i32_0 = arith.constant 0 : i32
    %c0_i32_1 = arith.constant 0 : i32
    return %c0_i32, %c0_i32_0 : i32, i32
  }
  func.func @transform_6(%arg0: i32) -> (i32, i32) {
    %c0_i32 = arith.constant 0 : i32
    %c0_i32_0 = arith.constant 0 : i32
    %c0_i32_1 = arith.constant 0 : i32
    return %c0_i32, %c0_i32_0 : i32, i32
  }
  func.func @transform_7(%arg0: i32) -> (i32, i32) {
    %c0_i32 = arith.constant 0 : i32
    %c0_i32_0 = arith.constant 0 : i32
    %c0_i32_1 = arith.constant 0 : i32
    return %c0_i32, %c0_i32_0 : i32, i32
  }
  func.func @transform_8(%arg0: i32) -> (i32, i32) {
    %c0_i32 = arith.constant 0 : i32
    %c0_i32_0 = arith.constant 0 : i32
    %c0_i32_1 = arith.constant 0 : i32
    return %c0_i32, %c0_i32_0 : i32, i32
  }
  func.func @transform_9(%arg0: i32) -> (i32, i32) {
    %c0_i32 = arith.constant 0 : i32
    %c0_i32_0 = arith.constant 0 : i32
    %c0_i32_1 = arith.constant 0 : i32
    return %c0_i32, %c0_i32_0 : i32, i32
  }
  func.func @transform_10(%arg0: i32) -> (i32, i32, i32) {
    %c0_i32 = arith.constant 0 : i32
    %c0_i32_0 = arith.constant 0 : i32
    %c0_i32_1 = arith.constant 0 : i32
    return %arg0, %c0_i32, %c0_i32_0 : i32, i32, i32
  }
  func.func @transform_11(%arg0: i32) -> (i32, i32) {
    %c0_i32 = arith.constant 0 : i32
    %c0_i32_0 = arith.constant 0 : i32
    %c0_i32_1 = arith.constant 0 : i32
    return %c0_i32, %c0_i32_0 : i32, i32
  }
}

</mosaic_0001>

<llo_original>
// kernel: tpu_custom_call.1
$region0: #{tpu_custom_call.1}
  #allocation0 [shape = 'u32[]', space=smem, size = 0x4, offset = 0x4, fixed_abs, tag = 'smem constant byte address 0x4 - core index']
  #allocation1 [shape = 'u32[144,128]{1,0:T(1,128)}', space=vmem, size = 0x12000, scoped, tag = 'internal scratch']
  %s0 = inlined_call_operand.hbm [shape: f32[1,8,128], index: 0, kind: input, shape index: {}]
  %s1 = inlined_call_operand.hbm [shape: f32[8,128], index: 1, kind: input, shape index: {}]
  %s2 = inlined_call_operand.hbm [shape: f32[128,128], index: 2, kind: input, shape index: {}]
  %s3 = inlined_call_operand.vmem [shape: f32[1,128], index: 3, kind: input, shape index: {}]
  %s4 = inlined_call_operand.hbm [shape: f32[256,384], index: 4, kind: input, shape index: {}]
  %s5 = inlined_call_operand.vmem [shape: f32[1,384], index: 5, kind: input, shape index: {}]
  %s6 = inlined_call_operand.hbm [shape: f32[128,128], index: 6, kind: input, shape index: {}]
  %s7 = inlined_call_operand.vmem [shape: f32[1,128], index: 7, kind: input, shape index: {}]
  %s8 = inlined_call_operand.hbm [shape: f32[128,128], index: 8, kind: input, shape index: {}]
  %s9 = inlined_call_operand.vmem [shape: f32[1,128], index: 9, kind: input, shape index: {}]
  %s10 = inlined_call_operand.hbm [shape: f32[1,8,128], index: 10, kind: output, shape index: {0}]
  %s11 = inlined_call_operand.hbm [shape: f32[8,128], index: 11, kind: output, shape index: {1}]
  %12 = xla_tuple %s10, %s11
  %s13 = sld [smem:[#allocation0]]
  $region86: #{tpu_custom_call.1} parent=0
    _
  %s15 = ssub.s32 1, %s13
  %s16 = scalar_select 0, %s15, %s13
  $region1: #{tpu_custom_call.1} parent=0
    #allocation2 [shape = 'u8[4096]{0}', space=vmem, size = 0x1000, scoped, tag = 'input window, operand 0, single buffered']
    #allocation3 [shape = 's32[1]{0}', space=sflag, size = 0x4, scoped, tag = 'scoped memory for tpu_custom_call.1']
    #allocation4 [shape = 's32[1]{0}', space=sflag, size = 0x4, scoped, tag = 'scoped memory for tpu_custom_call.1']
    #allocation5 [shape = 'u8[4096]{0}', space=vmem, size = 0x1000, scoped, tag = 'input window, operand 1, single buffered']
    #allocation6 [shape = 's32[1]{0}', space=sflag, size = 0x4, scoped, tag = 'scoped memory for tpu_custom_call.1']
    #allocation7 [shape = 'u8[65536]{0}', space=vmem, size = 0x10000, scoped, tag = 'input window, operand 2, single buffered']
    #allocation8 [shape = 'u8[393216]{0}', space=vmem, size = 0x60000, scoped, tag = 'input window, operand 4, single buffered']
    #allocation9 [shape = 's32[1]{0}', space=sflag, size = 0x4, scoped, tag = 'scoped memory for tpu_custom_call.1']
    #allocation10 [shape = 'u8[65536]{0}', space=vmem, size = 0x10000, scoped, tag = 'input window, operand 6, single buffered']
    #allocation11 [shape = 'u8[65536]{0}', space=vmem, size = 0x10000, scoped, tag = 'input window, operand 8, single buffered']
    #allocation12 [shape = 's32[1]{0}', space=sflag, size = 0x4, scoped, tag = 'scoped memory for tpu_custom_call.1']
    #allocation13 [shape = 'u8[4096]{0}', space=vmem, size = 0x1000, scoped, tag = 'output window, operand 0, single buffered']
    #allocation14 [shape = 'u8[4096]{0}', space=vmem, size = 0x1000, scoped, tag = 'output window, operand 1, single buffered']
    #allocation15 [shape = 's32[1]{0}', space=sflag, size = 0x4, scoped, tag = 'scoped memory for tpu_custom_call.1']
    %17 = vsyncpa [#allocation3], 0
    %18 = vsyncpa [#allocation6], 0
    %19 = vsyncpa [#allocation9], 0
    %20 = vsyncpa [#allocation12], 0
    %21 = vsyncpa [#allocation4], 0
    %22 = vsyncpa [#allocation15], 0
    // Predicated region
    $region2: #{tpu_custom_call.1} parent=1 // pred_check
      _
    $region3: #{tpu_custom_call.1} parent=1 // pred_check_branch
      %24 = sbr.rel (0) target = $region5
    $region4: #{tpu_custom_call.1} parent=1 // pred_region
      %s26 = ssub.s32 128, 128
      %27 = vsyncadd [#allocation3], %s26
      %s29 = sshll.u32 [#allocation2], 4
      %s30 = int_to_ptr.vmem [resolvable:$true] %s29
      %32 = dma.hbm_to_vmem [thread:$0]  %s0, 128, %s30, [#allocation3]
    $region5: #{tpu_custom_call.1} parent=1 // pred_fallthru
      _
    // Predicated region
    $region6: #{tpu_custom_call.1} parent=1 // pred_check
      _
    $region7: #{tpu_custom_call.1} parent=1 // pred_check_branch
      %34 = sbr.rel (0) target = $region9
    $region8: #{tpu_custom_call.1} parent=1 // pred_region
      %s36 = ssub.s32 128, 128
      %37 = vsyncadd [#allocation6], %s36
      %s39 = sshll.u32 [#allocation5], 4
      %s40 = int_to_ptr.vmem [resolvable:$true] %s39
      %42 = dma.hbm_to_vmem [thread:$0]  %s1, 128, %s40, [#allocation6]
    $region9: #{tpu_custom_call.1} parent=1 // pred_fallthru
      _
    // Predicated region
    $region10: #{tpu_custom_call.1} parent=1 // pred_check
      _
    $region11: #{tpu_custom_call.1} parent=1 // pred_check_branch
      %44 = sbr.rel (0) target = $region13
    $region12: #{tpu_custom_call.1} parent=1 // pred_region
      %s46 = ssub.s32 2048, 2048
      %47 = vsyncadd [#allocation6], %s46
      %s48 = sshll.u32 [#allocation7], 4
      %s49 = int_to_ptr.vmem [resolvable:$true] %s48
      %54 = dma.hbm_to_vmem [thread:$0]  %s2, 2048, %s49, [#allocation6], 128, 128, 8
    $region13: #{tpu_custom_call.1} parent=1 // pred_fallthru
      _
    // Predicated region
    $region14: #{tpu_custom_call.1} parent=1 // pred_check
      _
    $region15: #{tpu_custom_call.1} parent=1 // pred_check_branch
      %56 = sbr.rel (0) target = $region17
    $region16: #{tpu_custom_call.1} parent=1 // pred_region
      _
    $region17: #{tpu_custom_call.1} parent=1 // pred_fallthru
      _
    // Predicated region
    $region18: #{tpu_custom_call.1} parent=1 // pred_check
      _
    $region19: #{tpu_custom_call.1} parent=1 // pred_check_branch
      %58 = sbr.rel (0) target = $region21
    $region20: #{tpu_custom_call.1} parent=1 // pred_region
      %s60 = ssub.s32 12288, 12288
      %61 = vsyncadd [#allocation9], %s60
      %s62 = sshll.u32 [#allocation8], 4
      %s63 = int_to_ptr.vmem [resolvable:$true] %s62
      %68 = dma.hbm_to_vmem [thread:$0]  %s4, 12288, %s63, [#allocation9], 384, 384, 24
    $region21: #{tpu_custom_call.1} parent=1 // pred_fallthru
      _
    // Predicated region
    $region22: #{tpu_custom_call.1} parent=1 // pred_check
      _
    $region23: #{tpu_custom_call.1} parent=1 // pred_check_branch
      %70 = sbr.rel (0) target = $region25
    $region24: #{tpu_custom_call.1} parent=1 // pred_region
      _
    $region25: #{tpu_custom_call.1} parent=1 // pred_fallthru
      _
    // Predicated region
    $region26: #{tpu_custom_call.1} parent=1 // pred_check
      _
    $region27: #{tpu_custom_call.1} parent=1 // pred_check_branch
      %72 = sbr.rel (0) target = $region29
    $region28: #{tpu_custom_call.1} parent=1 // pred_region
      %s74 = ssub.s32 2048, 2048
      %75 = vsyncadd [#allocation9], %s74
      %s76 = sshll.u32 [#allocation10], 4
      %s77 = int_to_ptr.vmem [resolvable:$true] %s76
      %82 = dma.hbm_to_vmem [thread:$0]  %s6, 2048, %s77, [#allocation9], 128, 128, 8
    $region29: #{tpu_custom_call.1} parent=1 // pred_fallthru
      _
    // Predicated region
    $region30: #{tpu_custom_call.1} parent=1 // pred_check
      _
    $region31: #{tpu_custom_call.1} parent=1 // pred_check_branch
      %84 = sbr.rel (0) target = $region33
    $region32: #{tpu_custom_call.1} parent=1 // pred_region
      _
    $region33: #{tpu_custom_call.1} parent=1 // pred_fallthru
      _
    // Predicated region
    $region34: #{tpu_custom_call.1} parent=1 // pred_check
      _
    $region35: #{tpu_custom_call.1} parent=1 // pred_check_branch
      %86 = sbr.rel (0) target = $region37
    $region36: #{tpu_custom_call.1} parent=1 // pred_region
      %s88 = ssub.s32 2048, 2048
      %89 = vsyncadd [#allocation12], %s88
      %s90 = sshll.u32 [#allocation11], 4
      %s91 = int_to_ptr.vmem [resolvable:$true] %s90
      %96 = dma.hbm_to_vmem [thread:$0]  %s8, 2048, %s91, [#allocation12], 128, 128, 8
    $region37: #{tpu_custom_call.1} parent=1 // pred_fallthru
      _
    // Predicated region
    $region38: #{tpu_custom_call.1} parent=1 // pred_check
      _
    $region39: #{tpu_custom_call.1} parent=1 // pred_check_branch
      %98 = sbr.rel (0) target = $region41
    $region40: #{tpu_custom_call.1} parent=1 // pred_region
      _
    $region41: #{tpu_custom_call.1} parent=1 // pred_fallthru
      _
    // Predicated region
    $region42: #{tpu_custom_call.1} parent=1 // pred_check
      _
    $region43: #{tpu_custom_call.1} parent=1 // pred_check_branch
      %100 = sbr.rel (0) target = $region45
    $region44: #{tpu_custom_call.1} parent=1 // pred_region
      %101 = dma.done [#allocation3], 128
    $region45: #{tpu_custom_call.1} parent=1 // pred_fallthru
      _
    // Predicated region
    $region46: #{tpu_custom_call.1} parent=1 // pred_check
      _
    $region47: #{tpu_custom_call.1} parent=1 // pred_check_branch
      %103 = sbr.rel (0) target = $region49
    $region48: #{tpu_custom_call.1} parent=1 // pred_region
      %104 = dma.done [#allocation6], 128
    $region49: #{tpu_custom_call.1} parent=1 // pred_fallthru
      _
    // Predicated region
    $region50: #{tpu_custom_call.1} parent=1 // pred_check
      _
    $region51: #{tpu_custom_call.1} parent=1 // pred_check_branch
      %106 = sbr.rel (0) target = $region53
    $region52: #{tpu_custom_call.1} parent=1 // pred_region
      %107 = dma.done [#allocation6], 2048
    $region53: #{tpu_custom_call.1} parent=1 // pred_fallthru
      _
    // Predicated region
    $region54: #{tpu_custom_call.1} parent=1 // pred_check
      _
    $region55: #{tpu_custom_call.1} parent=1 // pred_check_branch
      %109 = sbr.rel (0) target = $region57
    $region56: #{tpu_custom_call.1} parent=1 // pred_region
      %110 = dma.done [#allocation9], 12288
    $region57: #{tpu_custom_call.1} parent=1 // pred_fallthru
      _
    // Predicated region
    $region58: #{tpu_custom_call.1} parent=1 // pred_check
      _
    $region59: #{tpu_custom_call.1} parent=1 // pred_check_branch
      %112 = sbr.rel (0) target = $region61
    $region60: #{tpu_custom_call.1} parent=1 // pred_region
      %113 = dma.done [#allocation9], 2048
    $region61: #{tpu_custom_call.1} parent=1 // pred_fallthru
      _
    // Predicated region
    $region62: #{tpu_custom_call.1} parent=1 // pred_check
      _
    $region63: #{tpu_custom_call.1} parent=1 // pred_check_branch
      %115 = sbr.rel (0) target = $region65
    $region64: #{tpu_custom_call.1} parent=1 // pred_region
      %116 = dma.done [#allocation12], 2048
    $region65: #{tpu_custom_call.1} parent=1 // pred_fallthru
      _
    %p117 = scmp.eq.s32.totalorder 0, 0
    // Predicated region
    $region66: #{tpu_custom_call.1} parent=1 // pred_check
      %p118 = pneg %p117
    $region67: #{tpu_custom_call.1} parent=1 // pred_check_branch
      %120 = sbr.rel (%p118) target = $region69
    $region68: #{tpu_custom_call.1} parent=1 // pred_region
      %v121 = vld [vmem:[#allocation5] sm:$0xff]
      %122 = vst [vmem:[#allocation14] sm:$0xff] %v121
    $region69: #{tpu_custom_call.1} parent=1 // pred_fallthru
      _
    %v123 = vld [vmem:[#allocation14] sm:$0xff]
    %v124 = vld [vmem:[#allocation2] sm:$0xff]
    %v125 = vld [vmem:[#allocation7] sm:$0xff]
    %v126 = vld [vmem:[#allocation7 + $0x8] sm:$0xff]
    %v127 = vld [vmem:[#allocation7 + $0x10] sm:$0xff]
    %v128 = vld [vmem:[#allocation7 + $0x18] sm:$0xff]
    %v129 = vld [vmem:[#allocation7 + $0x20] sm:$0xff]
    %v130 = vld [vmem:[#allocation7 + $0x28] sm:$0xff]
    %v131 = vld [vmem:[#allocation7 + $0x30] sm:$0xff]
    %v132 = vld [vmem:[#allocation7 + $0x38] sm:$0xff]
    %v133 = vld [vmem:[#allocation7 + $0x40] sm:$0xff]
    %v134 = vld [vmem:[#allocation7 + $0x48] sm:$0xff]
    %v135 = vld [vmem:[#allocation7 + $0x50] sm:$0xff]
    %v136 = vld [vmem:[#allocation7 + $0x58] sm:$0xff]
    %v137 = vld [vmem:[#allocation7 + $0x60] sm:$0xff]
    %v138 = vld [vmem:[#allocation7 + $0x68] sm:$0xff]
    %v139 = vld [vmem:[#allocation7 + $0x70] sm:$0xff]
    %v140 = vld [vmem:[#allocation7 + $0x78] sm:$0xff]
    %v141 = vld [vmem:[%s3] sm:$0x1]
    %v143 = vlaneseq
    %v144 = vshrl.u32 %v143, 7
    %v145 = vsub.s32 0, %v144
    %v146 = vrot.slane %v141, %v145
    %148 = vmatprep.subr.mxu0 0.0
    %149 = vmatpush1.msra.mxu0 %v125
    %150 = vmatprep.subr.mxu0 0.0
    %151 = vmatpush1.msra.mxu0 %v126
    %152 = vmatprep.subr.mxu0 0.0
    %153 = vmatpush1.msra.mxu0 %v127
    %154 = vmatprep.subr.mxu0 0.0
    %155 = vmatpush1.msra.mxu0 %v128
    %156 = vmatprep.subr.mxu0 0.0
    %157 = vmatpush1.msra.mxu0 %v129
    %158 = vmatprep.subr.mxu0 0.0
    %159 = vmatpush1.msra.mxu0 %v130
    %160 = vmatprep.subr.mxu0 0.0
    %161 = vmatpush1.msra.mxu0 %v131
    %162 = vmatprep.subr.mxu0 0.0
    %163 = vmatpush1.msra.mxu0 %v132
    %164 = vmatprep.subr.mxu0 0.0
    %165 = vmatpush1.msra.mxu0 %v133
    %166 = vmatprep.subr.mxu0 0.0
    %167 = vmatpush1.msra.mxu0 %v134
    %168 = vmatprep.subr.mxu0 0.0
    %169 = vmatpush1.msra.mxu0 %v135
    %170 = vmatprep.subr.mxu0 0.0
    %171 = vmatpush1.msra.mxu0 %v136
    %172 = vmatprep.subr.mxu0 0.0
    %173 = vmatpush1.msra.mxu0 %v137
    %174 = vmatprep.subr.mxu0 0.0
    %175 = vmatpush1.msra.mxu0 %v138
    %176 = vmatprep.subr.mxu0 0.0
    %177 = vmatpush1.msra.mxu0 %v139
    %178 = vmatprep.subr.mxu0 0.0
    %179 = vmatpush1.msra.mxu0 %v140
    %180 = vmatprep.subr.mxu0 0.0
    %181 = vmatpush1.msra.mxu0 0.0
    %182 = vmatprep.subr.mxu0 0.0
    %183 = vmatpush1.msra.mxu0 0.0
    %184 = vmatprep.subr.mxu0 0.0
    %185 = vmatpush1.msra.mxu0 0.0
    %186 = vmatprep.subr.mxu0 0.0
    %187 = vmatpush1.msra.mxu0 0.0
    %188 = vmatprep.subr.mxu0 0.0
    %189 = vmatpush1.msra.mxu0 0.0
    %190 = vmatprep.subr.mxu0 0.0
    %191 = vmatpush1.msra.mxu0 0.0
    %192 = vmatprep.subr.mxu0 0.0
    %193 = vmatpush1.msra.mxu0 0.0
    %194 = vmatprep.subr.mxu0 0.0
    %195 = vmatpush1.msra.mxu0 0.0
    %196 = vmatprep.subr.mxu0 0.0
    %197 = vmatpush1.msra.mxu0 0.0
    %198 = vmatprep.subr.mxu0 0.0
    %199 = vmatpush1.msra.mxu0 0.0
    %200 = vmatprep.subr.mxu0 0.0
    %201 = vmatpush1.msra.mxu0 0.0
    %202 = vmatprep.subr.mxu0 0.0
    %203 = vmatpush1.msra.mxu0 0.0
    %204 = vmatprep.subr.mxu0 0.0
    %205 = vmatpush1.msra.mxu0 0.0
    %206 = vmatprep.subr.mxu0 0.0
    %207 = vmatpush1.msra.mxu0 0.0
    %208 = vmatprep.subr.mxu0 0.0
    %209 = vmatpush1.msra.mxu0 0.0
    %210 = vmatprep.subr.mxu0 0.0
    %211 = vmatpush1.msra.mxu0 0.0
    %212 = vmatprep.mubr.f32.mxu0 0.0
    %213 = vmatmul.mubr.f32.gmra.mrb[0].mxu0 %v124
    %v214 = vpop.f32.mrb[0].mxu0
    %v215 = vadd.f32 %v146, %v214
    %v216 = vpop.f32.mrb[0].mxu0
    %217 = vdwg.mxu0
    %v218 = vmax.f32 %v215, 0.0
    %v219 = vld [vmem:[#allocation8] sm:$0xff]
    %v220 = vld [vmem:[#allocation8 + $0x8] sm:$0xff]
    %v221 = vld [vmem:[#allocation8 + $0x10] sm:$0xff]
    %v222 = vld [vmem:[#allocation8 + $0x18] sm:$0xff]
    %v223 = vld [vmem:[#allocation8 + $0x20] sm:$0xff]
    %v224 = vld [vmem:[#allocation8 + $0x28] sm:$0xff]
    %v225 = vld [vmem:[#allocation8 + $0x30] sm:$0xff]
    %v226 = vld [vmem:[#allocation8 + $0x38] sm:$0xff]
    %v227 = vld [vmem:[#allocation8 + $0x40] sm:$0xff]
    %v228 = vld [vmem:[#allocation8 + $0x48] sm:$0xff]
    %v229 = vld [vmem:[#allocation8 + $0x50] sm:$0xff]
    %v230 = vld [vmem:[#allocation8 + $0x58] sm:$0xff]
    %v231 = vld [vmem:[#allocation8 + $0x60] sm:$0xff]
    %v232 = vld [vmem:[#allocation8 + $0x68] sm:$0xff]
    %v233 = vld [vmem:[#allocation8 + $0x70] sm:$0xff]
    %v234 = vld [vmem:[#allocation8 + $0x78] sm:$0xff]
    %v235 = vld [vmem:[#allocation8 + $0x80] sm:$0xff]
    %v236 = vld [vmem:[#allocation8 + $0x88] sm:$0xff]
    %v237 = vld [vmem:[#allocation8 + $0x90] sm:$0xff]
    %v238 = vld [vmem:[#allocation8 + $0x98] sm:$0xff]
    %v239 = vld [vmem:[#allocation8 + $0xa0] sm:$0xff]
    %v240 = vld [vmem:[#allocation8 + $0xa8] sm:$0xff]
    %v241 = vld [vmem:[#allocation8 + $0xb0] sm:$0xff]
    %v242 = vld [vmem:[#allocation8 + $0xb8] sm:$0xff]
    %v243 = vld [vmem:[#allocation8 + $0xc0] sm:$0xff]
    %v244 = vld [vmem:[#allocation8 + $0xc8] sm:$0xff]
    %v245 = vld [vmem:[#allocation8 + $0xd0] sm:$0xff]
    %v246 = vld [vmem:[#allocation8 + $0xd8] sm:$0xff]
    %v247 = vld [vmem:[#allocation8 + $0xe0] sm:$0xff]
    %v248 = vld [vmem:[#allocation8 + $0xe8] sm:$0xff]
    %v249 = vld [vmem:[#allocation8 + $0xf0] sm:$0xff]
    %v250 = vld [vmem:[#allocation8 + $0xf8] sm:$0xff]
    %v251 = vld [vmem:[#allocation8 + $0x100] sm:$0xff]
    %v252 = vld [vmem:[#allocation8 + $0x108] sm:$0xff]
    %v253 = vld [vmem:[#allocation8 + $0x110] sm:$0xff]
    %v254 = vld [vmem:[#allocation8 + $0x118] sm:$0xff]
    %v255 = vld [vmem:[#allocation8 + $0x120] sm:$0xff]
    %v256 = vld [vmem:[#allocation8 + $0x128] sm:$0xff]
    %v257 = vld [vmem:[#allocation8 + $0x130] sm:$0xff]
    %v258 = vld [vmem:[#allocation8 + $0x138] sm:$0xff]
    %v259 = vld [vmem:[#allocation8 + $0x140] sm:$0xff]
    %v260 = vld [vmem:[#allocation8 + $0x148] sm:$0xff]
    %v261 = vld [vmem:[#allocation8 + $0x150] sm:$0xff]
    %v262 = vld [vmem:[#allocation8 + $0x158] sm:$0xff]
    %v263 = vld [vmem:[#allocation8 + $0x160] sm:$0xff]
    %v264 = vld [vmem:[#allocation8 + $0x168] sm:$0xff]
    %v265 = vld [vmem:[#allocation8 + $0x170] sm:$0xff]
    %v266 = vld [vmem:[#allocation8 + $0x178] sm:$0xff]
    %v267 = vld [vmem:[#allocation8 + $0x180] sm:$0xff]
    %v268 = vld [vmem:[#allocation8 + $0x188] sm:$0xff]
    %v269 = vld [vmem:[#allocation8 + $0x190] sm:$0xff]
    %v270 = vld [vmem:[#allocation8 + $0x198] sm:$0xff]
    %v271 = vld [vmem:[#allocation8 + $0x1a0] sm:$0xff]
    %v272 = vld [vmem:[#allocation8 + $0x1a8] sm:$0xff]
    %v273 = vld [vmem:[#allocation8 + $0x1b0] sm:$0xff]
    %v274 = vld [vmem:[#allocation8 + $0x1b8] sm:$0xff]
    %v275 = vld [vmem:[#allocation8 + $0x1c0] sm:$0xff]
    %v276 = vld [vmem:[#allocation8 + $0x1c8] sm:$0xff]
    %v277 = vld [vmem:[#allocation8 + $0x1d0] sm:$0xff]
    %v278 = vld [vmem:[#allocation8 + $0x1d8] sm:$0xff]
    %v279 = vld [vmem:[#allocation8 + $0x1e0] sm:$0xff]
    %v280 = vld [vmem:[#allocation8 + $0x1e8] sm:$0xff]
    %v281 = vld [vmem:[#allocation8 + $0x1f0] sm:$0xff]
    %v282 = vld [vmem:[#allocation8 + $0x1f8] sm:$0xff]
    %v283 = vld [vmem:[#allocation8 + $0x200] sm:$0xff]
    %v284 = vld [vmem:[#allocation8 + $0x208] sm:$0xff]
    %v285 = vld [vmem:[#allocation8 + $0x210] sm:$0xff]
    %v286 = vld [vmem:[#allocation8 + $0x218] sm:$0xff]
    %v287 = vld [vmem:[#allocation8 + $0x220] sm:$0xff]
    %v288 = vld [vmem:[#allocation8 + $0x228] sm:$0xff]
    %v289 = vld [vmem:[#allocation8 + $0x230] sm:$0xff]
    %v290 = vld [vmem:[#allocation8 + $0x238] sm:$0xff]
    %v291 = vld [vmem:[#allocation8 + $0x240] sm:$0xff]
    %v292 = vld [vmem:[#allocation8 + $0x248] sm:$0xff]
    %v293 = vld [vmem:[#allocation8 + $0x250] sm:$0xff]
    %v294 = vld [vmem:[#allocation8 + $0x258] sm:$0xff]
    %v295 = vld [vmem:[#allocation8 + $0x260] sm:$0xff]
    %v296 = vld [vmem:[#allocation8 + $0x268] sm:$0xff]
    %v297 = vld [vmem:[#allocation8 + $0x270] sm:$0xff]
    %v298 = vld [vmem:[#allocation8 + $0x278] sm:$0xff]
    %v299 = vld [vmem:[#allocation8 + $0x280] sm:$0xff]
    %v300 = vld [vmem:[#allocation8 + $0x288] sm:$0xff]
    %v301 = vld [vmem:[#allocation8 + $0x290] sm:$0xff]
    %v302 = vld [vmem:[#allocation8 + $0x298] sm:$0xff]
    %v303 = vld [vmem:[#allocation8 + $0x2a0] sm:$0xff]
    %v304 = vld [vmem:[#allocation8 + $0x2a8] sm:$0xff]
    %v305 = vld [vmem:[#allocation8 + $0x2b0] sm:$0xff]
    %v306 = vld [vmem:[#allocation8 + $0x2b8] sm:$0xff]
    %v307 = vld [vmem:[#allocation8 + $0x2c0] sm:$0xff]
    %v308 = vld [vmem:[#allocation8 + $0x2c8] sm:$0xff]
    %v309 = vld [vmem:[#allocation8 + $0x2d0] sm:$0xff]
    %v310 = vld [vmem:[#allocation8 + $0x2d8] sm:$0xff]
    %v311 = vld [vmem:[#allocation8 + $0x2e0] sm:$0xff]
    %v312 = vld [vmem:[#allocation8 + $0x2e8] sm:$0xff]
    %v313 = vld [vmem:[#allocation8 + $0x2f0] sm:$0xff]
    %v314 = vld [vmem:[#allocation8 + $0x2f8] sm:$0xff]
    %v315 = vld [vmem:[%s5] sm:$0x7]
    %v317 = vlaneseq
    %v318 = vshrl.u32 %v317, 7
    %v319 = vsub.s32 0, %v318
    %v320 = vrot.slane %v315, %v319
    %v321 = vlaneseq
    %v322 = vshrl.u32 %v321, 7
    %v323 = vsub.s32 1, %v322
    %v324 = vrot.slane %v315, %v323
    %v325 = vlaneseq
    %v326 = vshrl.u32 %v325, 7
    %v327 = vsub.s32 2, %v326
    %v328 = vrot.slane %v315, %v327
    %332 = vmatprep.subr.mxu0 %v220
    %333 = vmatpush1.msra.mxu0 %v219
    %334 = vmatprep.subr.mxu0 %v223
    %335 = vmatpush1.msra.mxu0 %v222
    %336 = vmatprep.subr.mxu0 %v226
    %337 = vmatpush1.msra.mxu0 %v225
    %338 = vmatprep.subr.mxu0 %v229
    %339 = vmatpush1.msra.mxu0 %v228
    %340 = vmatprep.subr.mxu0 %v232
    %341 = vmatpush1.msra.mxu0 %v231
    %342 = vmatprep.subr.mxu0 %v235
    %343 = vmatpush1.msra.mxu0 %v234
    %344 = vmatprep.subr.mxu0 %v238
    %345 = vmatpush1.msra.mxu0 %v237
    %346 = vmatprep.subr.mxu0 %v241
    %347 = vmatpush1.msra.mxu0 %v240
    %348 = vmatprep.subr.mxu0 %v244
    %349 = vmatpush1.msra.mxu0 %v243
    %350 = vmatprep.subr.mxu0 %v247
    %351 = vmatpush1.msra.mxu0 %v246
    %352 = vmatprep.subr.mxu0 %v250
    %353 = vmatpush1.msra.mxu0 %v249
    %354 = vmatprep.subr.mxu0 %v253
    %355 = vmatpush1.msra.mxu0 %v252
    %356 = vmatprep.subr.mxu0 %v256
    %357 = vmatpush1.msra.mxu0 %v255
    %358 = vmatprep.subr.mxu0 %v259
    %359 = vmatpush1.msra.mxu0 %v258
    %360 = vmatprep.subr.mxu0 %v262
    %361 = vmatpush1.msra.mxu0 %v261
    %362 = vmatprep.subr.mxu0 %v265
    %363 = vmatpush1.msra.mxu0 %v264
    %364 = vmatprep.subr.mxu0 %v268
    %365 = vmatpush1.msra.mxu0 %v267
    %366 = vmatprep.subr.mxu0 %v271
    %367 = vmatpush1.msra.mxu0 %v270
    %368 = vmatprep.subr.mxu0 %v274
    %369 = vmatpush1.msra.mxu0 %v273
    %370 = vmatprep.subr.mxu0 %v277
    %371 = vmatpush1.msra.mxu0 %v276
    %372 = vmatprep.subr.mxu0 %v280
    %373 = vmatpush1.msra.mxu0 %v279
    %374 = vmatprep.subr.mxu0 %v283
    %375 = vmatpush1.msra.mxu0 %v282
    %376 = vmatprep.subr.mxu0 %v286
    %377 = vmatpush1.msra.mxu0 %v285
    %378 = vmatprep.subr.mxu0 %v289
    %379 = vmatpush1.msra.mxu0 %v288
    %380 = vmatprep.subr.mxu0 %v292
    %381 = vmatpush1.msra.mxu0 %v291
    %382 = vmatprep.subr.mxu0 %v295
    %383 = vmatpush1.msra.mxu0 %v294
    %384 = vmatprep.subr.mxu0 %v298
    %385 = vmatpush1.msra.mxu0 %v297
    %386 = vmatprep.subr.mxu0 %v301
    %387 = vmatpush1.msra.mxu0 %v300
    %388 = vmatprep.subr.mxu0 %v304
    %389 = vmatpush1.msra.mxu0 %v303
    %390 = vmatprep.subr.mxu0 %v307
    %391 = vmatpush1.msra.mxu0 %v306
    %392 = vmatprep.subr.mxu0 %v310
    %393 = vmatpush1.msra.mxu0 %v309
    %394 = vmatprep.subr.mxu0 %v313
    %395 = vmatpush1.msra.mxu0 %v312
    %396 = vmatprep.mubr.f32.mxu0 %v123
    %397 = vmatmul.mubr.f32.gmra.mrb[0].mxu0 %v218
    %v398 = vpop.f32.mrb[0].mxu0
    %v399 = vadd.f32 %v320, %v398
    %v400 = vpop.f32.mrb[0].mxu0
    %v401 = vadd.f32 %v324, %v400
    %402 = vdwg.mxu0
    %403 = vmatprep.subr.mxu0 0.0
    %404 = vmatpush1.msra.mxu0 %v221
    %405 = vmatprep.subr.mxu0 0.0
    %406 = vmatpush1.msra.mxu0 %v224
    %407 = vmatprep.subr.mxu0 0.0
    %408 = vmatpush1.msra.mxu0 %v227
    %409 = vmatprep.subr.mxu0 0.0
    %410 = vmatpush1.msra.mxu0 %v230
    %411 = vmatprep.subr.mxu0 0.0
    %412 = vmatpush1.msra.mxu0 %v233
    %413 = vmatprep.subr.mxu0 0.0
    %414 = vmatpush1.msra.mxu0 %v236
    %415 = vmatprep.subr.mxu0 0.0
    %416 = vmatpush1.msra.mxu0 %v239
    %417 = vmatprep.subr.mxu0 0.0
    %418 = vmatpush1.msra.mxu0 %v242
    %419 = vmatprep.subr.mxu0 0.0
    %420 = vmatpush1.msra.mxu0 %v245
    %421 = vmatprep.subr.mxu0 0.0
    %422 = vmatpush1.msra.mxu0 %v248
    %423 = vmatprep.subr.mxu0 0.0
    %424 = vmatpush1.msra.mxu0 %v251
    %425 = vmatprep.subr.mxu0 0.0
    %426 = vmatpush1.msra.mxu0 %v254
    %427 = vmatprep.subr.mxu0 0.0
    %428 = vmatpush1.msra.mxu0 %v257
    %429 = vmatprep.subr.mxu0 0.0
    %430 = vmatpush1.msra.mxu0 %v260
    %431 = vmatprep.subr.mxu0 0.0
    %432 = vmatpush1.msra.mxu0 %v263
    %433 = vmatprep.subr.mxu0 0.0
    %434 = vmatpush1.msra.mxu0 %v266
    %435 = vmatprep.subr.mxu0 0.0
    %436 = vmatpush1.msra.mxu0 %v269
    %437 = vmatprep.subr.mxu0 0.0
    %438 = vmatpush1.msra.mxu0 %v272
    %439 = vmatprep.subr.mxu0 0.0
    %440 = vmatpush1.msra.mxu0 %v275
    %441 = vmatprep.subr.mxu0 0.0
    %442 = vmatpush1.msra.mxu0 %v278
    %443 = vmatprep.subr.mxu0 0.0
    %444 = vmatpush1.msra.mxu0 %v281
    %445 = vmatprep.subr.mxu0 0.0
    %446 = vmatpush1.msra.mxu0 %v284
    %447 = vmatprep.subr.mxu0 0.0
    %448 = vmatpush1.msra.mxu0 %v287
    %449 = vmatprep.subr.mxu0 0.0
    %450 = vmatpush1.msra.mxu0 %v290
    %451 = vmatprep.subr.mxu0 0.0
    %452 = vmatpush1.msra.mxu0 %v293
    %453 = vmatprep.subr.mxu0 0.0
    %454 = vmatpush1.msra.mxu0 %v296
    %455 = vmatprep.subr.mxu0 0.0
    %456 = vmatpush1.msra.mxu0 %v299
    %457 = vmatprep.subr.mxu0 0.0
    %458 = vmatpush1.msra.mxu0 %v302
    %459 = vmatprep.subr.mxu0 0.0
    %460 = vmatpush1.msra.mxu0 %v305
    %461 = vmatprep.subr.mxu0 0.0
    %462 = vmatpush1.msra.mxu0 %v308
    %463 = vmatprep.subr.mxu0 0.0
    %464 = vmatpush1.msra.mxu0 %v311
    %465 = vmatprep.subr.mxu0 0.0
    %466 = vmatpush1.msra.mxu0 %v314
    %467 = vmatprep.mubr.f32.mxu0 %v123
    %468 = vmatmul.mubr.f32.gmra.mrb[0].mxu0 %v218
    %v469 = vpop.f32.mrb[0].mxu0
    %v470 = vadd.f32 %v328, %v469
    %v471 = vpop.f32.mrb[0].mxu0
    %472 = vdwg.mxu0
    %v473 = vld [vmem:[#allocation10] sm:$0xff]
    %v474 = vld [vmem:[#allocation10 + $0x8] sm:$0xff]
    %v475 = vld [vmem:[#allocation10 + $0x10] sm:$0xff]
    %v476 = vld [vmem:[#allocation10 + $0x18] sm:$0xff]
    %v477 = vld [vmem:[#allocation10 + $0x20] sm:$0xff]
    %v478 = vld [vmem:[#allocation10 + $0x28] sm:$0xff]
    %v479 = vld [vmem:[#allocation10 + $0x30] sm:$0xff]
    %v480 = vld [vmem:[#allocation10 + $0x38] sm:$0xff]
    %v481 = vld [vmem:[#allocation10 + $0x40] sm:$0xff]
    %v482 = vld [vmem:[#allocation10 + $0x48] sm:$0xff]
    %v483 = vld [vmem:[#allocation10 + $0x50] sm:$0xff]
    %v484 = vld [vmem:[#allocation10 + $0x58] sm:$0xff]
    %v485 = vld [vmem:[#allocation10 + $0x60] sm:$0xff]
    %v486 = vld [vmem:[#allocation10 + $0x68] sm:$0xff]
    %v487 = vld [vmem:[#allocation10 + $0x70] sm:$0xff]
    %v488 = vld [vmem:[#allocation10 + $0x78] sm:$0xff]
    %v489 = vld [vmem:[%s7] sm:$0x1]
    %v491 = vlaneseq
    %v492 = vshrl.u32 %v491, 7
    %v493 = vsub.s32 0, %v492
    %v494 = vrot.slane %v489, %v493
    %496 = vmatprep.subr.mxu0 0.0
    %497 = vmatpush1.msra.mxu0 %v473
    %498 = vmatprep.subr.mxu0 0.0
    %499 = vmatpush1.msra.mxu0 %v474
    %500 = vmatprep.subr.mxu0 0.0
    %501 = vmatpush1.msra.mxu0 %v475
    %502 = vmatprep.subr.mxu0 0.0
    %503 = vmatpush1.msra.mxu0 %v476
    %504 = vmatprep.subr.mxu0 0.0
    %505 = vmatpush1.msra.mxu0 %v477
    %506 = vmatprep.subr.mxu0 0.0
    %507 = vmatpush1.msra.mxu0 %v478
    %508 = vmatprep.subr.mxu0 0.0
    %509 = vmatpush1.msra.mxu0 %v479
    %510 = vmatprep.subr.mxu0 0.0
    %511 = vmatpush1.msra.mxu0 %v480
    %512 = vmatprep.subr.mxu0 0.0
    %513 = vmatpush1.msra.mxu0 %v481
    %514 = vmatprep.subr.mxu0 0.0
    %515 = vmatpush1.msra.mxu0 %v482
    %516 = vmatprep.subr.mxu0 0.0
    %517 = vmatpush1.msra.mxu0 %v483
    %518 = vmatprep.subr.mxu0 0.0
    %519 = vmatpush1.msra.mxu0 %v484
    %520 = vmatprep.subr.mxu0 0.0
    %521 = vmatpush1.msra.mxu0 %v485
    %522 = vmatprep.subr.mxu0 0.0
    %523 = vmatpush1.msra.mxu0 %v486
    %524 = vmatprep.subr.mxu0 0.0
    %525 = vmatpush1.msra.mxu0 %v487
    %526 = vmatprep.subr.mxu0 0.0
    %527 = vmatpush1.msra.mxu0 %v488
    %528 = vmatprep.subr.mxu0 0.0
    %529 = vmatpush1.msra.mxu0 0.0
    %530 = vmatprep.subr.mxu0 0.0
    %531 = vmatpush1.msra.mxu0 0.0
    %532 = vmatprep.subr.mxu0 0.0
    %533 = vmatpush1.msra.mxu0 0.0
    %534 = vmatprep.subr.mxu0 0.0
    %535 = vmatpush1.msra.mxu0 0.0
    %536 = vmatprep.subr.mxu0 0.0
    %537 = vmatpush1.msra.mxu0 0.0
    %538 = vmatprep.subr.mxu0 0.0
    %539 = vmatpush1.msra.mxu0 0.0
    %540 = vmatprep.subr.mxu0 0.0
    %541 = vmatpush1.msra.mxu0 0.0
    %542 = vmatprep.subr.mxu0 0.0
    %543 = vmatpush1.msra.mxu0 0.0
    %544 = vmatprep.subr.mxu0 0.0
    %545 = vmatpush1.msra.mxu0 0.0
    %546 = vmatprep.subr.mxu0 0.0
    %547 = vmatpush1.msra.mxu0 0.0
    %548 = vmatprep.subr.mxu0 0.0
    %549 = vmatpush1.msra.mxu0 0.0
    %550 = vmatprep.subr.mxu0 0.0
    %551 = vmatpush1.msra.mxu0 0.0
    %552 = vmatprep.subr.mxu0 0.0
    %553 = vmatpush1.msra.mxu0 0.0
    %554 = vmatprep.subr.mxu0 0.0
    %555 = vmatpush1.msra.mxu0 0.0
    %556 = vmatprep.subr.mxu0 0.0
    %557 = vmatpush1.msra.mxu0 0.0
    %558 = vmatprep.subr.mxu0 0.0
    %559 = vmatpush1.msra.mxu0 0.0
    %560 = vmatprep.mubr.f32.mxu0 0.0
    %561 = vmatmul.mubr.f32.gmra.mrb[0].mxu0 %v123
    %v562 = vpop.f32.mrb[0].mxu0
    %v563 = vadd.f32 %v494, %v562
    %v564 = vpop.f32.mrb[0].mxu0
    %565 = vdwg.mxu0
    %v566 = vxor.u32 %v399, 2147483648
    %v567 = vmul.f32 %v566, 1.442695
    %v568 = vpow.pop %v567
    %v569 = vadd.f32 %v568, 1.0
    %v570 = vrcp.pop %v569
    %v571 = vmul.f32 1.0, %v570
    %v572 = vxor.u32 %v401, 2147483648
    %v573 = vmul.f32 %v572, 1.442695
    %v574 = vpow.pop %v573
    %v575 = vadd.f32 %v574, 1.0
    %v576 = vrcp.pop %v575
    %v577 = vmul.f32 1.0, %v576
    %v578 = vsub.f32 %v571, 1.0
    %v579 = vmul.f32 %v578, %v563
    %v580 = vadd.f32 %v470, %v579
    %v581 = vtanh.pop %v580
    %v582 = vsub.f32 1.0, %v577
    %v583 = vmul.f32 %v582, %v581
    %v584 = vmul.f32 %v577, %v123
    %v585 = vadd.f32 %v583, %v584
    %586 = vst [vmem:[#allocation14] sm:$0xff] %v585
    %v587 = vld [vmem:[#allocation11] sm:$0xff]
    %v588 = vld [vmem:[#allocation11 + $0x8] sm:$0xff]
    %v589 = vld [vmem:[#allocation11 + $0x10] sm:$0xff]
    %v590 = vld [vmem:[#allocation11 + $0x18] sm:$0xff]
    %v591 = vld [vmem:[#allocation11 + $0x20] sm:$0xff]
    %v592 = vld [vmem:[#allocation11 + $0x28] sm:$0xff]
    %v593 = vld [vmem:[#allocation11 + $0x30] sm:$0xff]
    %v594 = vld [vmem:[#allocation11 + $0x38] sm:$0xff]
    %v595 = vld [vmem:[#allocation11 + $0x40] sm:$0xff]
    %v596 = vld [vmem:[#allocation11 + $0x48] sm:$0xff]
    %v597 = vld [vmem:[#allocation11 + $0x50] sm:$0xff]
    %v598 = vld [vmem:[#allocation11 + $0x58] sm:$0xff]
    %v599 = vld [vmem:[#allocation11 + $0x60] sm:$0xff]
    %v600 = vld [vmem:[#allocation11 + $0x68] sm:$0xff]
    %v601 = vld [vmem:[#allocation11 + $0x70] sm:$0xff]
    %v602 = vld [vmem:[#allocation11 + $0x78] sm:$0xff]
    %v603 = vld [vmem:[%s9] sm:$0x1]
    %v605 = vlaneseq
    %v606 = vshrl.u32 %v605, 7
    %v607 = vsub.s32 0, %v606
    %v608 = vrot.slane %v603, %v607
    %610 = vmatprep.subr.mxu0 0.0
    %611 = vmatpush1.msra.mxu0 %v587
    %612 = vmatprep.subr.mxu0 0.0
    %613 = vmatpush1.msra.mxu0 %v588
    %614 = vmatprep.subr.mxu0 0.0
    %615 = vmatpush1.msra.mxu0 %v589
    %616 = vmatprep.subr.mxu0 0.0
    %617 = vmatpush1.msra.mxu0 %v590
    %618 = vmatprep.subr.mxu0 0.0
    %619 = vmatpush1.msra.mxu0 %v591
    %620 = vmatprep.subr.mxu0 0.0
    %621 = vmatpush1.msra.mxu0 %v592
    %622 = vmatprep.subr.mxu0 0.0
    %623 = vmatpush1.msra.mxu0 %v593
    %624 = vmatprep.subr.mxu0 0.0
    %625 = vmatpush1.msra.mxu0 %v594
    %626 = vmatprep.subr.mxu0 0.0
    %627 = vmatpush1.msra.mxu0 %v595
    %628 = vmatprep.subr.mxu0 0.0
    %629 = vmatpush1.msra.mxu0 %v596
    %630 = vmatprep.subr.mxu0 0.0
    %631 = vmatpush1.msra.mxu0 %v597
    %632 = vmatprep.subr.mxu0 0.0
    %633 = vmatpush1.msra.mxu0 %v598
    %634 = vmatprep.subr.mxu0 0.0
    %635 = vmatpush1.msra.mxu0 %v599
    %636 = vmatprep.subr.mxu0 0.0
    %637 = vmatpush1.msra.mxu0 %v600
    %638 = vmatprep.subr.mxu0 0.0
    %639 = vmatpush1.msra.mxu0 %v601
    %640 = vmatprep.subr.mxu0 0.0
    %641 = vmatpush1.msra.mxu0 %v602
    %642 = vmatprep.subr.mxu0 0.0
    %643 = vmatpush1.msra.mxu0 0.0
    %644 = vmatprep.subr.mxu0 0.0
    %645 = vmatpush1.msra.mxu0 0.0
    %646 = vmatprep.subr.mxu0 0.0
    %647 = vmatpush1.msra.mxu0 0.0
    %648 = vmatprep.subr.mxu0 0.0
    %649 = vmatpush1.msra.mxu0 0.0
    %650 = vmatprep.subr.mxu0 0.0
    %651 = vmatpush1.msra.mxu0 0.0
    %652 = vmatprep.subr.mxu0 0.0
    %653 = vmatpush1.msra.mxu0 0.0
    %654 = vmatprep.subr.mxu0 0.0
    %655 = vmatpush1.msra.mxu0 0.0
    %656 = vmatprep.subr.mxu0 0.0
    %657 = vmatpush1.msra.mxu0 0.0
    %658 = vmatprep.subr.mxu0 0.0
    %659 = vmatpush1.msra.mxu0 0.0
    %660 = vmatprep.subr.mxu0 0.0
    %661 = vmatpush1.msra.mxu0 0.0
    %662 = vmatprep.subr.mxu0 0.0
    %663 = vmatpush1.msra.mxu0 0.0
    %664 = vmatprep.subr.mxu0 0.0
    %665 = vmatpush1.msra.mxu0 0.0
    %666 = vmatprep.subr.mxu0 0.0
    %667 = vmatpush1.msra.mxu0 0.0
    %668 = vmatprep.subr.mxu0 0.0
    %669 = vmatpush1.msra.mxu0 0.0
    %670 = vmatprep.subr.mxu0 0.0
    %671 = vmatpush1.msra.mxu0 0.0
    %672 = vmatprep.subr.mxu0 0.0
    %673 = vmatpush1.msra.mxu0 0.0
    %674 = vmatprep.mubr.f32.mxu0 0.0
    %675 = vmatmul.mubr.f32.gmra.mrb[0].mxu0 %v585
    %v676 = vpop.f32.mrb[0].mxu0
    %v677 = vadd.f32 %v608, %v676
    %v678 = vpop.f32.mrb[0].mxu0
    %679 = vdwg.mxu0
    %680 = vst [vmem:[#allocation13] sm:$0xff] %v677
    // Predicated region
    $region70: #{tpu_custom_call.1} parent=1 // pred_check
      _
    $region71: #{tpu_custom_call.1} parent=1 // pred_check_branch
      %682 = sbr.rel (0) target = $region73
    $region72: #{tpu_custom_call.1} parent=1 // pred_region
      %s684 = ssub.s32 128, 128
      %685 = vsyncadd [#allocation4], %s684
      %s687 = sshll.u32 [#allocation13], 4
      %s688 = int_to_ptr.vmem [resolvable:$true] %s687
      %690 = dma.vmem_to_hbm [thread:$0]  %s688, 128, %s10, [#allocation4]
    $region73: #{tpu_custom_call.1} parent=1 // pred_fallthru
      _
    // Predicated region
    $region74: #{tpu_custom_call.1} parent=1 // pred_check
      _
    $region75: #{tpu_custom_call.1} parent=1 // pred_check_branch
      %692 = sbr.rel (0) target = $region77
    $region76: #{tpu_custom_call.1} parent=1 // pred_region
      %s694 = ssub.s32 128, 128
      %695 = vsyncadd [#allocation15], %s694
      %s697 = sshll.u32 [#allocation14], 4
      %s698 = int_to_ptr.vmem [resolvable:$true] %s697
      %700 = dma.vmem_to_hbm [thread:$0]  %s698, 128, %s11, [#allocation15]
    $region77: #{tpu_custom_call.1} parent=1 // pred_fallthru
      _
    // Predicated region
    $region78: #{tpu_custom_call.1} parent=1 // pred_check
      _
    $region79: #{tpu_custom_call.1} parent=1 // pred_check_branch
      %702 = sbr.rel (0) target = $region81
    $region80: #{tpu_custom_call.1} parent=1 // pred_region
      %703 = dma.done [#allocation4], 128
    $region81: #{tpu_custom_call.1} parent=1 // pred_fallthru
      _
    // Predicated region
    $region82: #{tpu_custom_call.1} parent=1 // pred_check
      _
    $region83: #{tpu_custom_call.1} parent=1 // pred_check_branch
      %705 = sbr.rel (0) target = $region85
    $region84: #{tpu_custom_call.1} parent=1 // pred_region
      %706 = dma.done [#allocation15], 128
    $region85: #{tpu_custom_call.1} parent=1 // pred_fallthru
      _
    %707 = vsyncpa [#allocation3], 1
    %708 = vsyncpa [#allocation6], 1
    %709 = vsyncpa [#allocation9], 1
    %710 = vsyncpa [#allocation12], 1
    %711 = vsyncpa [#allocation4], 1
    %712 = vsyncpa [#allocation15], 1

</llo_original>
